<compile_context>
chip_gen: v5e
topology: v5e:2x2
jax: 0.10.0
libtpu: 0.0.40
codegen_flags: <defaults>
</compile_context>

<pallas_src>
import jax
import jax.numpy as jnp
from jax.experimental import pallas as pl
from jax.experimental.pallas import tpu as pltpu


def _kernel_sigmoid(x):
    # exp runs on the EUP; exact reciprocal keeps tight (1e-5) parity with the
    # pure-JAX reference.  Flip approx=True only if a bundle dump shows the
    # VALU as the binding slot (today it is hidden under the DMA stream).
    # Note: exp(-x) can overflow to inf for strongly negative x; the result is
    # still the correct 0.0 in f32 at the magnitudes this head sees.
    return pl.reciprocal(1.0 + jnp.exp(-x), approx=False)


def critic_ranknet_kernel(x1_ref, s1_ref, x2_ref, s2_ref, w_ref, b_ref, out_ref):
    """Masked inputs -> shared 4-layer MLP (both branches) -> pairwise sigmoid.

    x*_ref, s*_ref: (tile_b, n_in)  native-width activations / selection masks
    w_ref:          (4, D, D)       per-layer weights [in, out], zero-padded to D
    b_ref:          (4, D)          per-layer biases, zero-padded to D
    out_ref:        (tile_b, n_out)
    """
    n_in = x1_ref.shape[-1]
    n_out = out_ref.shape[-1]

    # Layer-1 weight at the input's native width (sublane-aligned static slice
    # of the resident packed weights).
    w1 = w_ref[0][:n_in, :]

    def mlp(x):
        h = jnp.dot(x, w1, preferred_element_type=jnp.float32) + b_ref[0:1, :]
        h = jnp.maximum(h, 0.2 * h)                              # LeakyReLU(0.2)
        for layer in (1, 2):
            h = jnp.dot(h, w_ref[layer], preferred_element_type=jnp.float32)
            h = h + b_ref[layer:layer + 1, :]
            h = jnp.maximum(h, 0.2 * h)
        h = jnp.dot(h, w_ref[3], preferred_element_type=jnp.float32) + b_ref[3:4, :]
        # Padded output lanes would otherwise read sigmoid(0)=0.5 — keep this
        # slice in front of the head.
        return _kernel_sigmoid(h[:, :n_out])

    r1 = mlp(x1_ref[...] * s1_ref[...])   # branch 1 (selection mask on the VPU)
    r2 = mlp(x2_ref[...] * s2_ref[...])   # branch 2
    out_ref[...] = _kernel_sigmoid(r1 - r2)


def _round_up(x, m):
    return ((x + m - 1) // m) * m


def _ceil_div(a, b):
    return -(-a // b)


def _grid_params(batch, *, max_tile=4096, two_core_threshold=1024):
    """Pick (tile_b, n_tiles, padded_batch).

    tile_b is always a multiple of 8 (sublane rule) and <= max_tile; once the
    batch is large enough, force >= 2 tiles so the 'parallel' grid axis can
    shard across both v7x TensorCores.  Batch is padded up (by the wrapper) to
    tile_b * n_tiles if it is not already a multiple of the tile.
    """
    b8 = _round_up(batch, 8)
    n_tiles = max(_ceil_div(b8, max_tile), 2 if b8 >= two_core_threshold else 1)
    tile_b = _round_up(_ceil_div(b8, n_tiles), 8)
    n_tiles = _ceil_div(b8, tile_b)
    return tile_b, n_tiles, tile_b * n_tiles


def critic_ranknet_forward(input_1, selection_1, input_2, selection_2, params):
    w1, b1, w2, b2, w3, b3, w4, b4 = params
    batch, n_in = input_1.shape
    hidden = w1.shape[1]
    n_out = w4.shape[1]
    d = max(n_in, hidden, n_out)            # common padded feature width (32 here)

    def pad_w(w):
        return jnp.pad(w, ((0, d - w.shape[0]), (0, d - w.shape[1])))

    def pad_b(b):
        b = jnp.reshape(b, (1, -1))
        return jnp.pad(b, ((0, 0), (0, d - b.shape[1])))

    # Tiny (~16 KiB) packed weights/biases; VMEM-resident across batch tiles.
    w_packed = jnp.stack([pad_w(w1), pad_w(w2), pad_w(w3), pad_w(w4)], axis=0)   # (4, D, D)
    b_packed = jnp.concatenate([pad_b(b1), pad_b(b2), pad_b(b3), pad_b(b4)], 0)  # (4, D)

    tile_b, n_tiles, padded = _grid_params(batch)
    acts = (input_1, selection_1, input_2, selection_2)
    if padded != batch:                      # one-time row pad (only if batch % 8 != 0)
        acts = tuple(jnp.pad(a, ((0, padded - batch), (0, 0))) for a in acts)

    # Advisory scheduling hint: matmul flops, head exps, HBM bytes.
    flops = 2 * 2 * padded * (n_in * hidden + 2 * hidden * hidden + hidden * n_out)
    transcendentals = 3 * padded * n_out
    bytes_accessed = padded * (4 * n_in + n_out) * 4 + (w_packed.size + b_packed.size) * 4

    # TODO(synk): on v7x, sweep pipeline_mode=pl.Buffered(3) on act_spec; on
    # v6e, optionally stream activations as bf16 (breaks the 1e-5 parity check).
    act_spec = pl.BlockSpec((tile_b, n_in), lambda i: (i, 0))

    out = pl.pallas_call(
        critic_ranknet_kernel,
        out_shape=jax.ShapeDtypeStruct((padded, n_out), jnp.float32),
        grid=(n_tiles,),
        in_specs=[
            act_spec,                                    # input_1
            act_spec,                                    # selection_1
            act_spec,                                    # input_2
            act_spec,                                    # selection_2
            pl.BlockSpec((4, d, d), lambda i: (0, 0, 0)),  # weights, resident across tiles
            pl.BlockSpec((4, d), lambda i: (0, 0)),        # biases, resident across tiles
        ],
        out_specs=pl.BlockSpec((tile_b, n_out), lambda i: (i, 0)),
        compiler_params=pltpu.CompilerParams(
            dimension_semantics=("parallel",),           # v7x: shard batch tiles across both TCs
            vmem_limit_bytes=32 * 1024 * 1024,           # explicit budget (v7x scoped default 32 MiB of 64)
        ),
        cost_estimate=pl.CostEstimate(
            flops=int(flops),
            transcendentals=int(transcendentals),
            bytes_accessed=int(bytes_accessed),
        ),
    )(*acts, w_packed, b_packed)

    return out if padded == batch else out[:batch]


def init_params(key, inputs, hidden_size, outputs):
    """Deterministic init mirroring nn.Linear's U(-1/sqrt(fan_in), 1/sqrt(fan_in)).

    Weights stored transposed relative to PyTorch: [in, out]; biases as [1, out].
    """
    dims = [(inputs, hidden_size), (hidden_size, hidden_size),
            (hidden_size, hidden_size), (hidden_size, outputs)]
    params = []
    for i, (fan_in, fan_out) in enumerate(dims):
        kw, kb = jax.random.split(jax.random.fold_in(key, i))
        bound = 1.0 / jnp.sqrt(jnp.float32(fan_in))
        w = jax.random.uniform(kw, (fan_in, fan_out), jnp.float32, -bound, bound)
        b = jax.random.uniform(kb, (1, fan_out), jnp.float32, -bound, bound)
        params += [w, b]
    return tuple(params)


def reference_forward(input_1, selection_1, input_2, selection_2, params):
    """Pure-JAX reference matching the PyTorch Critic_RankNet forward."""
    w1, b1, w2, b2, w3, b3, w4, b4 = params

    def leaky(x):
        return jnp.where(x > 0, x, 0.2 * x)

    def mlp(x):
        h = leaky(x @ w1 + b1)
        h = leaky(h @ w2 + b2)
        h = leaky(h @ w3 + b3)
        return jax.nn.sigmoid(h @ w4 + b4)

    r1 = mlp(input_1 * selection_1)
    r2 = mlp(input_2 * selection_2)
    return jax.nn.sigmoid(r1 - r2)


if __name__ == "__main__":
    # Small shapes consistent with the module's forward.
    batch, inputs, hidden, outputs = 8, 16, 32, 4

    key = jax.random.PRNGKey(0)
    k1, k2, k3, k4, kp = jax.random.split(key, 5)

    input_1 = jax.random.normal(k1, (batch, inputs), jnp.float32)
    input_2 = jax.random.normal(k2, (batch, inputs), jnp.float32)
    # selection masks (0/1), as in the RankNet feature-selection setup
    selection_1 = (jax.random.uniform(k3, (batch, inputs)) > 0.5).astype(jnp.float32)
    selection_2 = (jax.random.uniform(k4, (batch, inputs)) > 0.5).astype(jnp.float32)

    params = init_params(kp, inputs, hidden, outputs)

    pred = critic_ranknet_forward(input_1, selection_1, input_2, selection_2, params)
    pred = jax.block_until_ready(pred)

    ref = reference_forward(input_1, selection_1, input_2, selection_2, params)
    assert pred.shape == (batch, outputs)
    assert jnp.allclose(pred, ref, atol=1e-5, rtol=1e-5), "mismatch vs reference"

    print("KERNEL_OK")
</pallas_src>

<mosaic_0001>
module attributes {stable_mosaic.version = 11 : i64} {
  func.func @critic_ranknet_kernel(%arg0: i32, %arg1: memref<8x16xf32, #tpu.memory_space<vmem>>, %arg2: memref<8x16xf32, #tpu.memory_space<vmem>>, %arg3: memref<8x16xf32, #tpu.memory_space<vmem>>, %arg4: memref<8x16xf32, #tpu.memory_space<vmem>>, %arg5: memref<4x32x32xf32, #tpu.memory_space<vmem>>, %arg6: memref<4x32xf32, #tpu.memory_space<vmem>>, %arg7: memref<8x4xf32, #tpu.memory_space<vmem>>) attributes {dimension_semantics = [#tpu.dimension_semantics<parallel>], iteration_bounds = array<i64: 1>, scalar_prefetch = 0 : i64, scratch_operands = 0 : i64, tpu.core_type = #tpu.core_type<tc>, window_params = [{transform_indices = @transform_0, window_bounds = array<i64: 8, 16>}, {transform_indices = @transform_1, window_bounds = array<i64: 8, 16>}, {transform_indices = @transform_2, window_bounds = array<i64: 8, 16>}, {transform_indices = @transform_3, window_bounds = array<i64: 8, 16>}, {pipeline_mode = #tpu.pipeline_mode<synchronous>, transform_indices = @transform_4, window_bounds = array<i64: 4, 32, 32>}, {pipeline_mode = #tpu.pipeline_mode<synchronous>, transform_indices = @transform_5, window_bounds = array<i64: 4, 32>}, {transform_indices = @transform_6, window_bounds = array<i64: 8, 4>}]} {
    %c0 = arith.constant 0 : index
    %c0_0 = arith.constant 0 : index
    %c0_1 = arith.constant 0 : index
    %0 = vector.load %arg5[%c0, %c0_0, %c0_1] : memref<4x32x32xf32, #tpu.memory_space<vmem>>, vector<1x32x32xf32>
    %1 = vector.shape_cast %0 : vector<1x32x32xf32> to vector<32x32xf32>
    %2 = vector.extract_strided_slice %1 {offsets = [0, 0], sizes = [16, 32], strides = [1, 1]} : vector<32x32xf32> to vector<16x32xf32>
    %c0_2 = arith.constant 0 : index
    %c0_3 = arith.constant 0 : index
    %3 = vector.load %arg1[%c0_2, %c0_3] : memref<8x16xf32, #tpu.memory_space<vmem>>, vector<8x16xf32>
    %c0_4 = arith.constant 0 : index
    %c0_5 = arith.constant 0 : index
    %4 = vector.load %arg2[%c0_4, %c0_5] : memref<8x16xf32, #tpu.memory_space<vmem>>, vector<8x16xf32>
    %5 = arith.mulf %3, %4 : vector<8x16xf32>
    %cst = arith.constant dense<0.000000e+00> : vector<8x32xf32>
    %6 = tpu.matmul %5, %2, %cst {dimension_numbers = #tpu.dot_dimension_numbers<[1], [0], [0], [1], [0, 0, 1, 1], [], []>} : vector<8x16xf32>, vector<16x32xf32>, vector<8x32xf32> -> vector<8x32xf32>
    %c0_6 = arith.constant 0 : index
    %c0_7 = arith.constant 0 : index
    %7 = vector.load %arg6[%c0_6, %c0_7] : memref<4x32xf32, #tpu.memory_space<vmem>>, vector<1x32xf32>
    %8 = vector.broadcast %7 : vector<1x32xf32> to vector<8x32xf32>
    %9 = arith.addf %6, %8 : vector<8x32xf32>
    %cst_8 = arith.constant 2.000000e-01 : f32
    %10 = vector.broadcast %cst_8 : f32 to vector<8x32xf32>
    %11 = arith.mulf %10, %9 : vector<8x32xf32>
    %12 = arith.maximumf %9, %11 : vector<8x32xf32>
    %c1 = arith.constant 1 : index
    %c0_9 = arith.constant 0 : index
    %c0_10 = arith.constant 0 : index
    %13 = vector.load %arg5[%c1, %c0_9, %c0_10] : memref<4x32x32xf32, #tpu.memory_space<vmem>>, vector<1x32x32xf32>
    %14 = vector.shape_cast %13 : vector<1x32x32xf32> to vector<32x32xf32>
    %cst_11 = arith.constant dense<0.000000e+00> : vector<8x32xf32>
    %15 = tpu.matmul %12, %14, %cst_11 {dimension_numbers = #tpu.dot_dimension_numbers<[1], [0], [0], [1], [0, 0, 1, 1], [], []>} : vector<8x32xf32>, vector<32x32xf32>, vector<8x32xf32> -> vector<8x32xf32>
    %c1_12 = arith.constant 1 : index
    %c0_13 = arith.constant 0 : index
    %16 = vector.load %arg6[%c1_12, %c0_13] : memref<4x32xf32, #tpu.memory_space<vmem>>, vector<1x32xf32>
    %17 = vector.broadcast %16 : vector<1x32xf32> to vector<8x32xf32>
    %18 = arith.addf %15, %17 : vector<8x32xf32>
    %cst_14 = arith.constant 2.000000e-01 : f32
    %19 = vector.broadcast %cst_14 : f32 to vector<8x32xf32>
    %20 = arith.mulf %19, %18 : vector<8x32xf32>
    %21 = arith.maximumf %18, %20 : vector<8x32xf32>
    %c2 = arith.constant 2 : index
    %c0_15 = arith.constant 0 : index
    %c0_16 = arith.constant 0 : index
    %22 = vector.load %arg5[%c2, %c0_15, %c0_16] : memref<4x32x32xf32, #tpu.memory_space<vmem>>, vector<1x32x32xf32>
    %23 = vector.shape_cast %22 : vector<1x32x32xf32> to vector<32x32xf32>
    %cst_17 = arith.constant dense<0.000000e+00> : vector<8x32xf32>
    %24 = tpu.matmul %21, %23, %cst_17 {dimension_numbers = #tpu.dot_dimension_numbers<[1], [0], [0], [1], [0, 0, 1, 1], [], []>} : vector<8x32xf32>, vector<32x32xf32>, vector<8x32xf32> -> vector<8x32xf32>
    %c2_18 = arith.constant 2 : index
    %c0_19 = arith.constant 0 : index
    %25 = vector.load %arg6[%c2_18, %c0_19] : memref<4x32xf32, #tpu.memory_space<vmem>>, vector<1x32xf32>
    %26 = vector.broadcast %25 : vector<1x32xf32> to vector<8x32xf32>
    %27 = arith.addf %24, %26 : vector<8x32xf32>
    %cst_20 = arith.constant 2.000000e-01 : f32
    %28 = vector.broadcast %cst_20 : f32 to vector<8x32xf32>
    %29 = arith.mulf %28, %27 : vector<8x32xf32>
    %30 = arith.maximumf %27, %29 : vector<8x32xf32>
    %c3 = arith.constant 3 : index
    %c0_21 = arith.constant 0 : index
    %c0_22 = arith.constant 0 : index
    %31 = vector.load %arg5[%c3, %c0_21, %c0_22] : memref<4x32x32xf32, #tpu.memory_space<vmem>>, vector<1x32x32xf32>
    %32 = vector.shape_cast %31 : vector<1x32x32xf32> to vector<32x32xf32>
    %cst_23 = arith.constant dense<0.000000e+00> : vector<8x32xf32>
    %33 = tpu.matmul %30, %32, %cst_23 {dimension_numbers = #tpu.dot_dimension_numbers<[1], [0], [0], [1], [0, 0, 1, 1], [], []>} : vector<8x32xf32>, vector<32x32xf32>, vector<8x32xf32> -> vector<8x32xf32>
    %c3_24 = arith.constant 3 : index
    %c0_25 = arith.constant 0 : index
    %34 = vector.load %arg6[%c3_24, %c0_25] : memref<4x32xf32, #tpu.memory_space<vmem>>, vector<1x32xf32>
    %35 = vector.broadcast %34 : vector<1x32xf32> to vector<8x32xf32>
    %36 = arith.addf %33, %35 : vector<8x32xf32>
    %37 = vector.extract_strided_slice %36 {offsets = [0, 0], sizes = [8, 4], strides = [1, 1]} : vector<8x32xf32> to vector<8x4xf32>
    %cst_26 = arith.constant 0.000000e+00 : f32
    %38 = vector.broadcast %cst_26 : f32 to vector<8x4xf32>
    %39 = arith.subf %38, %37 : vector<8x4xf32>
    %40 = math.exp %39 : vector<8x4xf32>
    %cst_27 = arith.constant 1.000000e+00 : f32
    %41 = vector.broadcast %cst_27 : f32 to vector<8x4xf32>
    %42 = arith.addf %41, %40 : vector<8x4xf32>
    %43 = tpu.reciprocal %42 : vector<8x4xf32> -> vector<8x4xf32>
    %c0_28 = arith.constant 0 : index
    %c0_29 = arith.constant 0 : index
    %44 = vector.load %arg3[%c0_28, %c0_29] : memref<8x16xf32, #tpu.memory_space<vmem>>, vector<8x16xf32>
    %c0_30 = arith.constant 0 : index
    %c0_31 = arith.constant 0 : index
    %45 = vector.load %arg4[%c0_30, %c0_31] : memref<8x16xf32, #tpu.memory_space<vmem>>, vector<8x16xf32>
    %46 = arith.mulf %44, %45 : vector<8x16xf32>
    %cst_32 = arith.constant dense<0.000000e+00> : vector<8x32xf32>
    %47 = tpu.matmul %46, %2, %cst_32 {dimension_numbers = #tpu.dot_dimension_numbers<[1], [0], [0], [1], [0, 0, 1, 1], [], []>} : vector<8x16xf32>, vector<16x32xf32>, vector<8x32xf32> -> vector<8x32xf32>
    %c0_33 = arith.constant 0 : index
    %c0_34 = arith.constant 0 : index
    %48 = vector.load %arg6[%c0_33, %c0_34] : memref<4x32xf32, #tpu.memory_space<vmem>>, vector<1x32xf32>
    %49 = vector.broadcast %48 : vector<1x32xf32> to vector<8x32xf32>
    %50 = arith.addf %47, %49 : vector<8x32xf32>
    %cst_35 = arith.constant 2.000000e-01 : f32
    %51 = vector.broadcast %cst_35 : f32 to vector<8x32xf32>
    %52 = arith.mulf %51, %50 : vector<8x32xf32>
    %53 = arith.maximumf %50, %52 : vector<8x32xf32>
    %c1_36 = arith.constant 1 : index
    %c0_37 = arith.constant 0 : index
    %c0_38 = arith.constant 0 : index
    %54 = vector.load %arg5[%c1_36, %c0_37, %c0_38] : memref<4x32x32xf32, #tpu.memory_space<vmem>>, vector<1x32x32xf32>
    %55 = vector.shape_cast %54 : vector<1x32x32xf32> to vector<32x32xf32>
    %cst_39 = arith.constant dense<0.000000e+00> : vector<8x32xf32>
    %56 = tpu.matmul %53, %55, %cst_39 {dimension_numbers = #tpu.dot_dimension_numbers<[1], [0], [0], [1], [0, 0, 1, 1], [], []>} : vector<8x32xf32>, vector<32x32xf32>, vector<8x32xf32> -> vector<8x32xf32>
    %c1_40 = arith.constant 1 : index
    %c0_41 = arith.constant 0 : index
    %57 = vector.load %arg6[%c1_40, %c0_41] : memref<4x32xf32, #tpu.memory_space<vmem>>, vector<1x32xf32>
    %58 = vector.broadcast %57 : vector<1x32xf32> to vector<8x32xf32>
    %59 = arith.addf %56, %58 : vector<8x32xf32>
    %cst_42 = arith.constant 2.000000e-01 : f32
    %60 = vector.broadcast %cst_42 : f32 to vector<8x32xf32>
    %61 = arith.mulf %60, %59 : vector<8x32xf32>
    %62 = arith.maximumf %59, %61 : vector<8x32xf32>
    %c2_43 = arith.constant 2 : index
    %c0_44 = arith.constant 0 : index
    %c0_45 = arith.constant 0 : index
    %63 = vector.load %arg5[%c2_43, %c0_44, %c0_45] : memref<4x32x32xf32, #tpu.memory_space<vmem>>, vector<1x32x32xf32>
    %64 = vector.shape_cast %63 : vector<1x32x32xf32> to vector<32x32xf32>
    %cst_46 = arith.constant dense<0.000000e+00> : vector<8x32xf32>
    %65 = tpu.matmul %62, %64, %cst_46 {dimension_numbers = #tpu.dot_dimension_numbers<[1], [0], [0], [1], [0, 0, 1, 1], [], []>} : vector<8x32xf32>, vector<32x32xf32>, vector<8x32xf32> -> vector<8x32xf32>
    %c2_47 = arith.constant 2 : index
    %c0_48 = arith.constant 0 : index
    %66 = vector.load %arg6[%c2_47, %c0_48] : memref<4x32xf32, #tpu.memory_space<vmem>>, vector<1x32xf32>
    %67 = vector.broadcast %66 : vector<1x32xf32> to vector<8x32xf32>
    %68 = arith.addf %65, %67 : vector<8x32xf32>
    %cst_49 = arith.constant 2.000000e-01 : f32
    %69 = vector.broadcast %cst_49 : f32 to vector<8x32xf32>
    %70 = arith.mulf %69, %68 : vector<8x32xf32>
    %71 = arith.maximumf %68, %70 : vector<8x32xf32>
    %c3_50 = arith.constant 3 : index
    %c0_51 = arith.constant 0 : index
    %c0_52 = arith.constant 0 : index
    %72 = vector.load %arg5[%c3_50, %c0_51, %c0_52] : memref<4x32x32xf32, #tpu.memory_space<vmem>>, vector<1x32x32xf32>
    %73 = vector.shape_cast %72 : vector<1x32x32xf32> to vector<32x32xf32>
    %cst_53 = arith.constant dense<0.000000e+00> : vector<8x32xf32>
    %74 = tpu.matmul %71, %73, %cst_53 {dimension_numbers = #tpu.dot_dimension_numbers<[1], [0], [0], [1], [0, 0, 1, 1], [], []>} : vector<8x32xf32>, vector<32x32xf32>, vector<8x32xf32> -> vector<8x32xf32>
    %c3_54 = arith.constant 3 : index
    %c0_55 = arith.constant 0 : index
    %75 = vector.load %arg6[%c3_54, %c0_55] : memref<4x32xf32, #tpu.memory_space<vmem>>, vector<1x32xf32>
    %76 = vector.broadcast %75 : vector<1x32xf32> to vector<8x32xf32>
    %77 = arith.addf %74, %76 : vector<8x32xf32>
    %78 = vector.extract_strided_slice %77 {offsets = [0, 0], sizes = [8, 4], strides = [1, 1]} : vector<8x32xf32> to vector<8x4xf32>
    %cst_56 = arith.constant 0.000000e+00 : f32
    %79 = vector.broadcast %cst_56 : f32 to vector<8x4xf32>
    %80 = arith.subf %79, %78 : vector<8x4xf32>
    %81 = math.exp %80 : vector<8x4xf32>
    %cst_57 = arith.constant 1.000000e+00 : f32
    %82 = vector.broadcast %cst_57 : f32 to vector<8x4xf32>
    %83 = arith.addf %82, %81 : vector<8x4xf32>
    %84 = tpu.reciprocal %83 : vector<8x4xf32> -> vector<8x4xf32>
    %85 = arith.subf %43, %84 : vector<8x4xf32>
    %cst_58 = arith.constant 0.000000e+00 : f32
    %86 = vector.broadcast %cst_58 : f32 to vector<8x4xf32>
    %87 = arith.subf %86, %85 : vector<8x4xf32>
    %88 = math.exp %87 : vector<8x4xf32>
    %cst_59 = arith.constant 1.000000e+00 : f32
    %89 = vector.broadcast %cst_59 : f32 to vector<8x4xf32>
    %90 = arith.addf %89, %88 : vector<8x4xf32>
    %91 = tpu.reciprocal %90 : vector<8x4xf32> -> vector<8x4xf32>
    %c0_60 = arith.constant 0 : index
    %c0_61 = arith.constant 0 : index
    %92 = vector.load %arg7[%c0_60, %c0_61] : memref<8x4xf32, #tpu.memory_space<vmem>>, vector<8x4xf32>
    tpu.vector_store %arg7[%c0_60, %c0_61], %91 {strides = array<i32>} : memref<8x4xf32, #tpu.memory_space<vmem>>, vector<8x4xf32>,
    return
  }
  func.func @transform_0(%arg0: i32) -> (i32, i32) {
    %c0_i32 = arith.constant 0 : i32
    %c0_i32_0 = arith.constant 0 : i32
    return %arg0, %c0_i32 : i32, i32
  }
  func.func @transform_1(%arg0: i32) -> (i32, i32) {
    %c0_i32 = arith.constant 0 : i32
    %c0_i32_0 = arith.constant 0 : i32
    return %arg0, %c0_i32 : i32, i32
  }
  func.func @transform_2(%arg0: i32) -> (i32, i32) {
    %c0_i32 = arith.constant 0 : i32
    %c0_i32_0 = arith.constant 0 : i32
    return %arg0, %c0_i32 : i32, i32
  }
  func.func @transform_3(%arg0: i32) -> (i32, i32) {
    %c0_i32 = arith.constant 0 : i32
    %c0_i32_0 = arith.constant 0 : i32
    return %arg0, %c0_i32 : i32, i32
  }
  func.func @transform_4(%arg0: i32) -> (i32, i32, i32) {
    %c0_i32 = arith.constant 0 : i32
    %c0_i32_0 = arith.constant 0 : i32
    %c0_i32_1 = arith.constant 0 : i32
    %c0_i32_2 = arith.constant 0 : i32
    return %c0_i32, %c0_i32_0, %c0_i32_1 : i32, i32, i32
  }
  func.func @transform_5(%arg0: i32) -> (i32, i32) {
    %c0_i32 = arith.constant 0 : i32
    %c0_i32_0 = arith.constant 0 : i32
    %c0_i32_1 = arith.constant 0 : i32
    return %c0_i32, %c0_i32_0 : i32, i32
  }
  func.func @transform_6(%arg0: i32) -> (i32, i32) {
    %c0_i32 = arith.constant 0 : i32
    %c0_i32_0 = arith.constant 0 : i32
    return %arg0, %c0_i32 : i32, i32
  }
}

</mosaic_0001>

<llo_original>
// kernel: tpu_custom_call.1
$region0: #{tpu_custom_call.1}
  #allocation0 [shape = 'u32[]', space=smem, size = 0x4, offset = 0x4, fixed_abs, tag = 'smem constant byte address 0x4 - core index']
  #allocation1 [shape = 'u32[72,128]{1,0:T(1,128)}', space=vmem, size = 0x9000, scoped, tag = 'internal scratch']
  %s0 = inlined_call_operand.hbm [shape: f32[8,16], index: 0, kind: input, shape index: {}]
  %s1 = inlined_call_operand.hbm [shape: f32[8,16], index: 1, kind: input, shape index: {}]
  %s2 = inlined_call_operand.hbm [shape: f32[8,16], index: 2, kind: input, shape index: {}]
  %s3 = inlined_call_operand.hbm [shape: f32[8,16], index: 3, kind: input, shape index: {}]
  %s4 = inlined_call_operand.hbm [shape: f32[4,32,32], index: 4, kind: input, shape index: {}]
  %s5 = inlined_call_operand.vmem [shape: f32[4,32], index: 5, kind: input, shape index: {}]
  %s6 = inlined_call_operand.vmem [shape: f32[8,4], index: 6, kind: output, shape index: {}]
  %s7 = sld [smem:[#allocation0]]
  $region54: #{tpu_custom_call.1} parent=0
    _
  %s9 = ssub.s32 1, %s7
  %s10 = scalar_select 0, %s9, %s7
  $region1: #{tpu_custom_call.1} parent=0
    #allocation2 [shape = 'u8[4096]{0}', space=vmem, size = 0x1000, scoped, tag = 'input window, operand 0, single buffered']
    #allocation3 [shape = 's32[1]{0}', space=sflag, size = 0x4, scoped, tag = 'scoped memory for tpu_custom_call.1']
    #allocation4 [shape = 'u8[4096]{0}', space=vmem, size = 0x1000, scoped, tag = 'input window, operand 1, single buffered']
    #allocation5 [shape = 's32[1]{0}', space=sflag, size = 0x4, scoped, tag = 'scoped memory for tpu_custom_call.1']
    #allocation6 [shape = 'u8[4096]{0}', space=vmem, size = 0x1000, scoped, tag = 'input window, operand 2, single buffered']
    #allocation7 [shape = 'u8[4096]{0}', space=vmem, size = 0x1000, scoped, tag = 'input window, operand 3, single buffered']
    #allocation8 [shape = 's32[1]{0}', space=sflag, size = 0x4, scoped, tag = 'scoped memory for tpu_custom_call.1']
    #allocation9 [shape = 'u8[65536]{0}', space=vmem, size = 0x10000, scoped, tag = 'input window, operand 4, single buffered']
    %11 = vsyncpa [#allocation3], 0
    %12 = vsyncpa [#allocation5], 0
    %13 = vsyncpa [#allocation8], 0
    // Predicated region
    $region2: #{tpu_custom_call.1} parent=1 // pred_check
      _
    $region3: #{tpu_custom_call.1} parent=1 // pred_check_branch
      %15 = sbr.rel (0) target = $region5
    $region4: #{tpu_custom_call.1} parent=1 // pred_region
      %17 = vsyncadd [#allocation3], 0
      %s19 = sshll.u32 %s0, 4
      %s20 = int_to_ptr.hbm [resolvable:$true] %s19
      %s21 = sshll.u32 [#allocation2], 4
      %s22 = int_to_ptr.vmem [resolvable:$true] %s21
      %24 = dma.hbm_to_vmem [thread:$0]  %s20, 128, %s22, [#allocation3]
    $region5: #{tpu_custom_call.1} parent=1 // pred_fallthru
      _
    // Predicated region
    $region6: #{tpu_custom_call.1} parent=1 // pred_check
      _
    $region7: #{tpu_custom_call.1} parent=1 // pred_check_branch
      %26 = sbr.rel (0) target = $region9
    $region8: #{tpu_custom_call.1} parent=1 // pred_region
      %28 = vsyncadd [#allocation5], 0
      %s30 = sshll.u32 %s1, 4
      %s31 = int_to_ptr.hbm [resolvable:$true] %s30
      %s32 = sshll.u32 [#allocation4], 4
      %s33 = int_to_ptr.vmem [resolvable:$true] %s32
      %35 = dma.hbm_to_vmem [thread:$0]  %s31, 128, %s33, [#allocation5]
    $region9: #{tpu_custom_call.1} parent=1 // pred_fallthru
      _
    // Predicated region
    $region10: #{tpu_custom_call.1} parent=1 // pred_check
      _
    $region11: #{tpu_custom_call.1} parent=1 // pred_check_branch
      %37 = sbr.rel (0) target = $region13
    $region12: #{tpu_custom_call.1} parent=1 // pred_region
      %39 = vsyncadd [#allocation5], 0
      %s41 = sshll.u32 %s2, 4
      %s42 = int_to_ptr.hbm [resolvable:$true] %s41
      %s43 = sshll.u32 [#allocation6], 4
      %s44 = int_to_ptr.vmem [resolvable:$true] %s43
      %46 = dma.hbm_to_vmem [thread:$0]  %s42, 128, %s44, [#allocation5]
    $region13: #{tpu_custom_call.1} parent=1 // pred_fallthru
      _
    // Predicated region
    $region14: #{tpu_custom_call.1} parent=1 // pred_check
      _
    $region15: #{tpu_custom_call.1} parent=1 // pred_check_branch
      %48 = sbr.rel (0) target = $region17
    $region16: #{tpu_custom_call.1} parent=1 // pred_region
      %50 = vsyncadd [#allocation8], 0
      %s52 = sshll.u32 %s3, 4
      %s53 = int_to_ptr.hbm [resolvable:$true] %s52
      %s54 = sshll.u32 [#allocation7], 4
      %s55 = int_to_ptr.vmem [resolvable:$true] %s54
      %57 = dma.hbm_to_vmem [thread:$0]  %s53, 128, %s55, [#allocation8]
    $region17: #{tpu_custom_call.1} parent=1 // pred_fallthru
      _
    // Predicated region
    $region18: #{tpu_custom_call.1} parent=1 // pred_check
      _
    $region19: #{tpu_custom_call.1} parent=1 // pred_check_branch
      %59 = sbr.rel (0) target = $region21
    $region20: #{tpu_custom_call.1} parent=1 // pred_region
      %61 = vsyncadd [#allocation8], 0
      %s62 = sshll.u32 %s4, 4
      %s63 = int_to_ptr.hbm [resolvable:$true] %s62
      %s64 = sshll.u32 [#allocation9], 4
      %s65 = int_to_ptr.vmem [resolvable:$true] %s64
      %70 = dma.hbm_to_vmem [thread:$0]  %s63, 2048, %s65, [#allocation8], 128, 128, 8
    $region21: #{tpu_custom_call.1} parent=1 // pred_fallthru
      _
    // Predicated region
    $region22: #{tpu_custom_call.1} parent=1 // pred_check
      _
    $region23: #{tpu_custom_call.1} parent=1 // pred_check_branch
      %72 = sbr.rel (0) target = $region25
    $region24: #{tpu_custom_call.1} parent=1 // pred_region
      _
    $region25: #{tpu_custom_call.1} parent=1 // pred_fallthru
      _
    // Predicated region
    $region26: #{tpu_custom_call.1} parent=1 // pred_check
      _
    $region27: #{tpu_custom_call.1} parent=1 // pred_check_branch
      %74 = sbr.rel (0) target = $region29
    $region28: #{tpu_custom_call.1} parent=1 // pred_region
      %76 = dma.done [#allocation3], 128
    $region29: #{tpu_custom_call.1} parent=1 // pred_fallthru
      _
    // Predicated region
    $region30: #{tpu_custom_call.1} parent=1 // pred_check
      _
    $region31: #{tpu_custom_call.1} parent=1 // pred_check_branch
      %78 = sbr.rel (0) target = $region33
    $region32: #{tpu_custom_call.1} parent=1 // pred_region
      %80 = dma.done [#allocation5], 128
    $region33: #{tpu_custom_call.1} parent=1 // pred_fallthru
      _
    // Predicated region
    $region34: #{tpu_custom_call.1} parent=1 // pred_check
      _
    $region35: #{tpu_custom_call.1} parent=1 // pred_check_branch
      %82 = sbr.rel (0) target = $region37
    $region36: #{tpu_custom_call.1} parent=1 // pred_region
      %84 = dma.done [#allocation5], 128
    $region37: #{tpu_custom_call.1} parent=1 // pred_fallthru
      _
    // Predicated region
    $region38: #{tpu_custom_call.1} parent=1 // pred_check
      _
    $region39: #{tpu_custom_call.1} parent=1 // pred_check_branch
      %86 = sbr.rel (0) target = $region41
    $region40: #{tpu_custom_call.1} parent=1 // pred_region
      %88 = dma.done [#allocation8], 128
    $region41: #{tpu_custom_call.1} parent=1 // pred_fallthru
      _
    // Predicated region
    $region42: #{tpu_custom_call.1} parent=1 // pred_check
      _
    $region43: #{tpu_custom_call.1} parent=1 // pred_check_branch
      %90 = sbr.rel (0) target = $region45
    $region44: #{tpu_custom_call.1} parent=1 // pred_region
      %92 = dma.done [#allocation8], 2048
    $region45: #{tpu_custom_call.1} parent=1 // pred_fallthru
      _
    %v93 = vld [vmem:[#allocation9] sm:$0xff]
    %v94 = vld [vmem:[#allocation9 + $0x8] sm:$0xff]
    %v95 = vld [vmem:[#allocation2] sm:$0xff]
    %v96 = vld [vmem:[#allocation4] sm:$0xff]
    %v97 = vmul.f32 %v95, %v96
    %v98 = vld [vmem:[%s5] sm:$0x1]
    %v99 = vperm.slane %v98, 0
    %vm100 = vcmask 130048
    %v102 = vsel %vm100, %v97, 0
    %104 = vmatpush.msra.mxu0 0.0
    %105 = vmatpush.msra.mxu0 0.0
    %106 = vmatpush.msra.mxu0 0.0
    %107 = vmatpush.msra.mxu0 0.0
    %108 = vmatpush.msra.mxu0 0.0
    %109 = vmatpush.msra.mxu0 0.0
    %110 = vmatpush.msra.mxu0 0.0
    %111 = vmatpush.msra.mxu0 0.0
    %112 = vmatpush.msra.mxu0 0.0
    %113 = vmatpush.msra.mxu0 0.0
    %114 = vmatpush.msra.mxu0 0.0
    %115 = vmatpush.msra.mxu0 0.0
    %116 = vmatpush.msra.mxu0 0.0
    %117 = vmatpush.msra.mxu0 0.0
    %118 = vmatpush.msra.mxu0 %v94
    %119 = vmatpush.msra.mxu0 %v93
    %120 = vmatmul.f32.gmra.mxu0 %v102
    %v121 = vpop.f32.mrf.mxu0
    %v122 = vadd.f32 %v99, %v121
    %123 = vdwg.mxu0
    %v124 = vmul.f32 %v122, 0.2
    %v125 = vmax.f32 %v122, %v124
    %s126 = scalar_lea.vmem [#allocation9], 32
    %v127 = vld [vmem:[%s126] sm:$0xff]
    %v128 = vld [vmem:[%s126 + $0x8] sm:$0xff]
    %v129 = vld [vmem:[%s126 + $0x10] sm:$0xff]
    %v130 = vld [vmem:[%s126 + $0x18] sm:$0xff]
    %v131 = vld [vmem:[%s5 + $0x1] sm:$0x1]
    %v132 = vperm.slane %v131, 0
    %vm133 = vcmask 261120
    %v135 = vsel %vm133, %v125, 0
    %137 = vmatpush.msra.mxu0 0.0
    %138 = vmatpush.msra.mxu0 0.0
    %139 = vmatpush.msra.mxu0 0.0
    %140 = vmatpush.msra.mxu0 0.0
    %141 = vmatpush.msra.mxu0 0.0
    %142 = vmatpush.msra.mxu0 0.0
    %143 = vmatpush.msra.mxu0 0.0
    %144 = vmatpush.msra.mxu0 0.0
    %145 = vmatpush.msra.mxu0 0.0
    %146 = vmatpush.msra.mxu0 0.0
    %147 = vmatpush.msra.mxu0 0.0
    %148 = vmatpush.msra.mxu0 0.0
    %149 = vmatpush.msra.mxu0 %v130
    %150 = vmatpush.msra.mxu0 %v129
    %151 = vmatpush.msra.mxu0 %v128
    %152 = vmatpush.msra.mxu0 %v127
    %153 = vmatmul.f32.gmra.mxu0 %v135
    %v154 = vpop.f32.mrf.mxu0
    %v155 = vadd.f32 %v132, %v154
    %156 = vdwg.mxu0
    %v157 = vmul.f32 %v155, 0.2
    %v158 = vmax.f32 %v155, %v157
    %s159 = scalar_lea.vmem [#allocation9], 64
    %v160 = vld [vmem:[%s159] sm:$0xff]
    %v161 = vld [vmem:[%s159 + $0x8] sm:$0xff]
    %v162 = vld [vmem:[%s159 + $0x10] sm:$0xff]
    %v163 = vld [vmem:[%s159 + $0x18] sm:$0xff]
    %v164 = vld [vmem:[%s5 + $0x2] sm:$0x1]
    %v165 = vperm.slane %v164, 0
    %v167 = vsel %vm133, %v158, 0
    %169 = vmatpush.msra.mxu0 0.0
    %170 = vmatpush.msra.mxu0 0.0
    %171 = vmatpush.msra.mxu0 0.0
    %172 = vmatpush.msra.mxu0 0.0
    %173 = vmatpush.msra.mxu0 0.0
    %174 = vmatpush.msra.mxu0 0.0
    %175 = vmatpush.msra.mxu0 0.0
    %176 = vmatpush.msra.mxu0 0.0
    %177 = vmatpush.msra.mxu0 0.0
    %178 = vmatpush.msra.mxu0 0.0
    %179 = vmatpush.msra.mxu0 0.0
    %180 = vmatpush.msra.mxu0 0.0
    %181 = vmatpush.msra.mxu0 %v163
    %182 = vmatpush.msra.mxu0 %v162
    %183 = vmatpush.msra.mxu0 %v161
    %184 = vmatpush.msra.mxu0 %v160
    %185 = vmatmul.f32.gmra.mxu0 %v167
    %v186 = vpop.f32.mrf.mxu0
    %v187 = vadd.f32 %v165, %v186
    %188 = vdwg.mxu0
    %v189 = vmul.f32 %v187, 0.2
    %v190 = vmax.f32 %v187, %v189
    %s191 = scalar_lea.vmem [#allocation9], 96
    %v192 = vld [vmem:[%s191] sm:$0xff]
    %v193 = vld [vmem:[%s191 + $0x8] sm:$0xff]
    %v194 = vld [vmem:[%s191 + $0x10] sm:$0xff]
    %v195 = vld [vmem:[%s191 + $0x18] sm:$0xff]
    %v196 = vld [vmem:[%s5 + $0x3] sm:$0x1]
    %v197 = vperm.slane %v196, 0
    %v199 = vsel %vm133, %v190, 0
    %201 = vmatpush.msra.mxu0 0.0
    %202 = vmatpush.msra.mxu0 0.0
    %203 = vmatpush.msra.mxu0 0.0
    %204 = vmatpush.msra.mxu0 0.0
    %205 = vmatpush.msra.mxu0 0.0
    %206 = vmatpush.msra.mxu0 0.0
    %207 = vmatpush.msra.mxu0 0.0
    %208 = vmatpush.msra.mxu0 0.0
    %209 = vmatpush.msra.mxu0 0.0
    %210 = vmatpush.msra.mxu0 0.0
    %211 = vmatpush.msra.mxu0 0.0
    %212 = vmatpush.msra.mxu0 0.0
    %213 = vmatpush.msra.mxu0 %v195
    %214 = vmatpush.msra.mxu0 %v194
    %215 = vmatpush.msra.mxu0 %v193
    %216 = vmatpush.msra.mxu0 %v192
    %217 = vmatmul.f32.gmra.mxu0 %v199
    %v218 = vpop.f32.mrf.mxu0
    %v219 = vadd.f32 %v197, %v218
    %220 = vdwg.mxu0
    %v221 = vsub.f32 0.0, %v219
    %v222 = vmul.f32 %v221, 1.442695
    %v223 = vpow.pop %v222
    %v224 = vadd.f32 %v223, 1.0
    %v225 = vrcp.pop %v224
    %v226 = vmul.f32 %v224, %v225
    %v227 = vsub.f32 1.0, %v226
    %v228 = vmul.f32 %v225, %v227
    %v229 = vadd.f32 %v225, %v228
    %vm230 = vweird.f32 %v224
    %vm231 = vweird.f32 %v225
    %vm232 = vmor %vm230, %vm231
    %v233 = vsel %vm232, %v225, %v229
    %v234 = vand.u32 2147483647, %v224
    %vm235 = vcmp.eq.f32.partialorder %v234, 8.507059e+37
    %v236 = vand.u32 %v224, 2147483648
    %v237 = vor.u32 1.1754944e-38, %v236
    %v238 = vsel %vm235, %v237, %v233
    %v239 = vld [vmem:[#allocation6] sm:$0xff]
    %v240 = vld [vmem:[#allocation7] sm:$0xff]
    %v241 = vmul.f32 %v239, %v240
    %v243 = vsel %vm100, %v241, 0
    %245 = vmatpush.msra.mxu0 0.0
    %246 = vmatpush.msra.mxu0 0.0
    %247 = vmatpush.msra.mxu0 0.0
    %248 = vmatpush.msra.mxu0 0.0
    %249 = vmatpush.msra.mxu0 0.0
    %250 = vmatpush.msra.mxu0 0.0
    %251 = vmatpush.msra.mxu0 0.0
    %252 = vmatpush.msra.mxu0 0.0
    %253 = vmatpush.msra.mxu0 0.0
    %254 = vmatpush.msra.mxu0 0.0
    %255 = vmatpush.msra.mxu0 0.0
    %256 = vmatpush.msra.mxu0 0.0
    %257 = vmatpush.msra.mxu0 0.0
    %258 = vmatpush.msra.mxu0 0.0
    %259 = vmatpush.msra.mxu0 %v94
    %260 = vmatpush.msra.mxu0 %v93
    %261 = vmatmul.f32.gmra.mxu0 %v243
    %v262 = vpop.f32.mrf.mxu0
    %v263 = vadd.f32 %v99, %v262
    %264 = vdwg.mxu0
    %v265 = vmul.f32 %v263, 0.2
    %v266 = vmax.f32 %v263, %v265
    %v268 = vsel %vm133, %v266, 0
    %270 = vmatpush.msra.mxu0 0.0
    %271 = vmatpush.msra.mxu0 0.0
    %272 = vmatpush.msra.mxu0 0.0
    %273 = vmatpush.msra.mxu0 0.0
    %274 = vmatpush.msra.mxu0 0.0
    %275 = vmatpush.msra.mxu0 0.0
    %276 = vmatpush.msra.mxu0 0.0
    %277 = vmatpush.msra.mxu0 0.0
    %278 = vmatpush.msra.mxu0 0.0
    %279 = vmatpush.msra.mxu0 0.0
    %280 = vmatpush.msra.mxu0 0.0
    %281 = vmatpush.msra.mxu0 0.0
    %282 = vmatpush.msra.mxu0 %v130
    %283 = vmatpush.msra.mxu0 %v129
    %284 = vmatpush.msra.mxu0 %v128
    %285 = vmatpush.msra.mxu0 %v127
    %286 = vmatmul.f32.gmra.mxu0 %v268
    %v287 = vpop.f32.mrf.mxu0
    %v288 = vadd.f32 %v132, %v287
    %289 = vdwg.mxu0
    %v290 = vmul.f32 %v288, 0.2
    %v291 = vmax.f32 %v288, %v290
    %v293 = vsel %vm133, %v291, 0
    %295 = vmatpush.msra.mxu0 0.0
    %296 = vmatpush.msra.mxu0 0.0
    %297 = vmatpush.msra.mxu0 0.0
    %298 = vmatpush.msra.mxu0 0.0
    %299 = vmatpush.msra.mxu0 0.0
    %300 = vmatpush.msra.mxu0 0.0
    %301 = vmatpush.msra.mxu0 0.0
    %302 = vmatpush.msra.mxu0 0.0
    %303 = vmatpush.msra.mxu0 0.0
    %304 = vmatpush.msra.mxu0 0.0
    %305 = vmatpush.msra.mxu0 0.0
    %306 = vmatpush.msra.mxu0 0.0
    %307 = vmatpush.msra.mxu0 %v163
    %308 = vmatpush.msra.mxu0 %v162
    %309 = vmatpush.msra.mxu0 %v161
    %310 = vmatpush.msra.mxu0 %v160
    %311 = vmatmul.f32.gmra.mxu0 %v293
    %v312 = vpop.f32.mrf.mxu0
    %v313 = vadd.f32 %v165, %v312
    %314 = vdwg.mxu0
    %v315 = vmul.f32 %v313, 0.2
    %v316 = vmax.f32 %v313, %v315
    %v318 = vsel %vm133, %v316, 0
    %320 = vmatpush.msra.mxu0 0.0
    %321 = vmatpush.msra.mxu0 0.0
    %322 = vmatpush.msra.mxu0 0.0
    %323 = vmatpush.msra.mxu0 0.0
    %324 = vmatpush.msra.mxu0 0.0
    %325 = vmatpush.msra.mxu0 0.0
    %326 = vmatpush.msra.mxu0 0.0
    %327 = vmatpush.msra.mxu0 0.0
    %328 = vmatpush.msra.mxu0 0.0
    %329 = vmatpush.msra.mxu0 0.0
    %330 = vmatpush.msra.mxu0 0.0
    %331 = vmatpush.msra.mxu0 0.0
    %332 = vmatpush.msra.mxu0 %v195
    %333 = vmatpush.msra.mxu0 %v194
    %334 = vmatpush.msra.mxu0 %v193
    %335 = vmatpush.msra.mxu0 %v192
    %336 = vmatmul.f32.gmra.mxu0 %v318
    %v337 = vpop.f32.mrf.mxu0
    %v338 = vadd.f32 %v197, %v337
    %339 = vdwg.mxu0
    %v340 = vsub.f32 0.0, %v338
    %v341 = vmul.f32 %v340, 1.442695
    %v342 = vpow.pop %v341
    %v343 = vadd.f32 %v342, 1.0
    %v344 = vrcp.pop %v343
    %v345 = vmul.f32 %v343, %v344
    %v346 = vsub.f32 1.0, %v345
    %v347 = vmul.f32 %v344, %v346
    %v348 = vadd.f32 %v344, %v347
    %vm349 = vweird.f32 %v343
    %vm350 = vweird.f32 %v344
    %vm351 = vmor %vm349, %vm350
    %v352 = vsel %vm351, %v344, %v348
    %v353 = vand.u32 2147483647, %v343
    %vm354 = vcmp.eq.f32.partialorder %v353, 8.507059e+37
    %v355 = vand.u32 %v343, 2147483648
    %v356 = vor.u32 1.1754944e-38, %v355
    %v357 = vsel %vm354, %v356, %v352
    %v358 = vsub.f32 %v238, %v357
    %v359 = vsub.f32 0.0, %v358
    %v360 = vmul.f32 %v359, 1.442695
    %v361 = vpow.pop %v360
    %v362 = vadd.f32 %v361, 1.0
    %v363 = vrcp.pop %v362
    %v364 = vmul.f32 %v362, %v363
    %v365 = vsub.f32 1.0, %v364
    %v366 = vmul.f32 %v363, %v365
    %v367 = vadd.f32 %v363, %v366
    %vm368 = vweird.f32 %v362
    %vm369 = vweird.f32 %v363
    %vm370 = vmor %vm368, %vm369
    %v371 = vsel %vm370, %v363, %v367
    %v372 = vand.u32 2147483647, %v362
    %vm373 = vcmp.eq.f32.partialorder %v372, 8.507059e+37
    %v374 = vand.u32 %v362, 2147483648
    %v375 = vor.u32 1.1754944e-38, %v374
    %v376 = vsel %vm373, %v375, %v371
    %vm377 = vcmask 31744
    %378 = vst.msk [vmem:[%s6] sm:$0xff] %vm377, %v376
    // Predicated region
    $region46: #{tpu_custom_call.1} parent=1 // pred_check
      _
    $region47: #{tpu_custom_call.1} parent=1 // pred_check_branch
      %380 = sbr.rel (0) target = $region49
    $region48: #{tpu_custom_call.1} parent=1 // pred_region
      _
    $region49: #{tpu_custom_call.1} parent=1 // pred_fallthru
      _
    // Predicated region
    $region50: #{tpu_custom_call.1} parent=1 // pred_check
      _
    $region51: #{tpu_custom_call.1} parent=1 // pred_check_branch
      %382 = sbr.rel (0) target = $region53
    $region52: #{tpu_custom_call.1} parent=1 // pred_region
      _
    $region53: #{tpu_custom_call.1} parent=1 // pred_fallthru
      _
    %383 = vsyncpa [#allocation3], 1
    %384 = vsyncpa [#allocation5], 1
    %385 = vsyncpa [#allocation8], 1

</llo_original>
